<compile_context>
chip_gen: v7x
topology: tpu7x:2x2x1
jax: 0.10.0
libtpu: 0.0.40
codegen_flags: <defaults>
</compile_context>

<pallas_src>
import jax
import jax.numpy as jnp
from jax.experimental import pallas as pl
from jax.experimental.pallas import tpu as pltpu


def _softmax_2quad_kernel(x_ref, o_ref):
    # Block: (TM, d) -- reduce over the lane (last) axis.
    # Keep only two block-sized f32 temporaries live: t and quad.
    t = x_ref[...].astype(jnp.float32) + 5.0     # f32 accumulation (free, mem-bound)
    quad = t * t
    # Exact (non-approx) reciprocal of the (TM, 1) row sums; tiny either way.
    inv = pl.reciprocal(jnp.sum(quad, axis=-1, keepdims=True), approx=False)
    o_ref[...] = (quad * inv).astype(o_ref.dtype)


def _softmax_2quad_xla(x, dim):
    """Plain-XLA fallback (tiny / non-lane-dense d, or non-last reduction dim)."""
    xf = x.astype(jnp.float32)
    quad = (xf + 5.0) * (xf + 5.0)
    out = quad / jnp.sum(quad, axis=dim, keepdims=True)
    return out.astype(x.dtype)


def _align_up(v, a):
    return ((v + a - 1) // a) * a


def softmax_2quad(x, dim=-1):
    """Pallas equivalent of softmax_2QUAD.forward for a 4-D input x."""
    assert x.ndim == 4, "softmax_2QUAD expects a 4-D tensor (a, b, c, d)"
    dim = dim % 4
    a, b, c, d = x.shape

    # Fallbacks:
    #  (1) reduction not over the last axis -> fall back to XLA.
    #      TODO(synk): dim == 2 could be handled in-kernel with a sublane-axis
    #      reduction (jnp.sum(axis=-2) over (c, TN) blocks) when c is
    #      sublane-aligned; only worth it if profiles show XLA does >1 HBM pass.
    #  (2) d not lane-dense (< 128 or not a multiple of 128) -> masked vst.msk
    #      partial stores + pallas_call overhead exceed the work.
    if dim != 3 or d < 128 or (d % 128) != 0:
        return _softmax_2quad_xla(x, dim)

    rows = a * b * c
    x2 = x.reshape(rows, d)

    itemsize = jnp.dtype(x.dtype).itemsize
    # Sublane alignment: 8 rows for 32-bit, 16 for 16-bit, 32 for 8-bit dtypes.
    row_align = max(8, 32 // itemsize)

    # Generation-aware sizing via VMEM capacity (v7x = 64 MiB, v5e/v6e = 128 MiB).
    try:
        vmem_cap = int(pltpu.get_tpu_info().vmem_capacity_bytes)
    except Exception:  # pragma: no cover - conservative default (v7x = 64 MiB)
        vmem_cap = 64 * 1024 * 1024
    is_small_vmem = vmem_cap <= (64 << 20)       # v7x-like: faster HBM, smaller VMEM

    # Per-step byte target for ONE input block: ~4 MiB on v7x (3.2 TB/s HBM),
    # ~2 MiB on v5e/v6e -- enough to amortize the ~0.35 us fixed step cost.
    target_bytes = (4 << 20) if is_small_vmem else (2 << 20)
    tm_target = max(row_align, target_bytes // (d * itemsize))

    # VMEM cap: double-buffered in+out blocks in input dtype (4*itemsize/elem)
    # plus ~2 live f32 intermediates of the block (8 bytes/elem) must fit half
    # of physical VMEM.
    budget = vmem_cap // 2
    tm_cap_vmem = max(row_align, budget // ((4 * itemsize + 8) * d))

    # Depth cap: keep >= ~4 grid steps when the input allows (2 per TC on v7x).
    tm_cap_depth = max(row_align, pl.cdiv(rows, 4))

    tm = min(tm_target, tm_cap_vmem, tm_cap_depth)
    tm = max(row_align, (tm // row_align) * row_align)
    tm = min(tm, _align_up(rows, row_align))

    # Round the step count up to an even number (>= 2) so the parallel axis
    # shards evenly across v7x's two TensorCores; negligible cost elsewhere.
    steps = pl.cdiv(rows, tm)
    if steps > 1 and steps % 2 != 0:
        steps += 1
        tm = max(row_align, _align_up(pl.cdiv(rows, steps), row_align))
        steps = pl.cdiv(rows, tm)

    grid = (steps,)

    # Scoped VMEM limit: pipelined in/out buffers + f32 intermediates + 4 MiB
    # headroom, never below the 32 MiB default and always >= 8 MiB below
    # physical capacity (Mosaic internal scratch / semaphores).
    pipelined_bytes = 4 * tm * d * itemsize      # 2 (double buffer) * (in + out)
    f32_temp_bytes = 2 * tm * d * 4              # t and quad
    needed = pipelined_bytes + f32_temp_bytes + (4 << 20)
    vmem_limit = int(min(vmem_cap - (8 << 20), max(needed, 32 << 20)))

    out2 = pl.pallas_call(
        _softmax_2quad_kernel,
        out_shape=jax.ShapeDtypeStruct((rows, d), x.dtype),
        grid_spec=pltpu.PrefetchScalarGridSpec(
            num_scalar_prefetch=0,
            grid=grid,
            in_specs=[pl.BlockSpec((tm, d), lambda i: (i, 0))],
            out_specs=pl.BlockSpec((tm, d), lambda i: (i, 0)),
        ),
        compiler_params=pltpu.CompilerParams(
            dimension_semantics=("parallel",),
            vmem_limit_bytes=vmem_limit,
        ),
    )(x2)

    return out2.reshape(a, b, c, d)

# TODO(synk): the single biggest remaining win is fusing the (x+5)^2
# normalization into the producing attention-score kernel (flash-style online
# denominator), eliminating the standalone HBM read+write of the full
# (B, H, S, S) score tensor; the standalone kernel above already sits at the
# HBM roofline.


if __name__ == "__main__":
    key = jax.random.PRNGKey(0)

    # (batch=2, heads=4, seq=128, seq=128) attention-score-like input.
    # d = 128 is lane-dense, so this exercises the Pallas path.
    x = jax.random.normal(key, (2, 4, 128, 128), dtype=jnp.float32)
    out = jax.block_until_ready(softmax_2quad(x, dim=-1))

    quad = (x + 5.0) * (x + 5.0)
    ref = quad / jnp.sum(quad, axis=-1, keepdims=True)
    assert out.shape == x.shape and out.dtype == x.dtype
    assert jnp.allclose(out, ref, atol=1e-5, rtol=1e-5)

    # bf16 input: in-kernel f32 accumulation, bf16 store.
    xb = x.astype(jnp.bfloat16)
    outb = jax.block_until_ready(softmax_2quad(xb, dim=-1))
    xb32 = xb.astype(jnp.float32)
    quadb = (xb32 + 5.0) * (xb32 + 5.0)
    refb = quadb / jnp.sum(quadb, axis=-1, keepdims=True)
    assert outb.shape == xb.shape and outb.dtype == jnp.bfloat16
    assert jnp.allclose(outb.astype(jnp.float32), refb, atol=2e-2, rtol=2e-2)

    # Tiny / non-lane-dense d takes the XLA fallback (overhead-bound regime).
    xs = jax.random.normal(jax.random.PRNGKey(1), (2, 4, 16, 16), dtype=jnp.float32)
    outs = jax.block_until_ready(softmax_2quad(xs, dim=-1))
    quads = (xs + 5.0) * (xs + 5.0)
    refs = quads / jnp.sum(quads, axis=-1, keepdims=True)
    assert jnp.allclose(outs, refs, atol=1e-5, rtol=1e-5)

    print("KERNEL_OK")
</pallas_src>

<mosaic_0001>
module attributes {stable_mosaic.version = 11 : i64} {
  func.func @_softmax_2quad_kernel(%arg0: i32, %arg1: memref<256x128xf32, #tpu.memory_space<vmem>>, %arg2: memref<256x128xf32, #tpu.memory_space<vmem>>) attributes {dimension_semantics = [#tpu.dimension_semantics<parallel>], iteration_bounds = array<i64: 4>, scalar_prefetch = 0 : i64, scratch_operands = 0 : i64, tpu.core_type = #tpu.core_type<tc>, window_params = [{transform_indices = @transform_0, window_bounds = array<i64: 256, 128>}, {transform_indices = @transform_1, window_bounds = array<i64: 256, 128>}]} {
    %c0 = arith.constant 0 : index
    %c0_0 = arith.constant 0 : index
    %0 = vector.load %arg1[%c0, %c0_0] : memref<256x128xf32, #tpu.memory_space<vmem>>, vector<256x128xf32>
    %cst = arith.constant 5.000000e+00 : f32
    %1 = vector.broadcast %cst : f32 to vector<256x128xf32>
    %2 = arith.addf %0, %1 : vector<256x128xf32>
    %3 = arith.mulf %2, %2 : vector<256x128xf32>
    %cst_1 = arith.constant dense<0.000000e+00> : vector<256xf32>
    %4 = vector.multi_reduction <add>, %3, %cst_1 [1] : vector<256x128xf32> to vector<256xf32>
    %5 = vector.shape_cast %4 : vector<256xf32> to vector<256x1xf32>
    %6 = tpu.reciprocal %5 : vector<256x1xf32> -> vector<256x1xf32>
    %7 = vector.broadcast %6 : vector<256x1xf32> to vector<256x128xf32>
    %8 = arith.mulf %3, %7 : vector<256x128xf32>
    %c0_2 = arith.constant 0 : index
    %c0_3 = arith.constant 0 : index
    %9 = vector.load %arg2[%c0_2, %c0_3] : memref<256x128xf32, #tpu.memory_space<vmem>>, vector<256x128xf32>
    tpu.vector_store %arg2[%c0_2, %c0_3], %8 {strides = array<i32>} : memref<256x128xf32, #tpu.memory_space<vmem>>, vector<256x128xf32>,
    return
  }
  func.func @transform_0(%arg0: i32) -> (i32, i32) {
    %c0_i32 = arith.constant 0 : i32
    %c0_i32_0 = arith.constant 0 : i32
    return %arg0, %c0_i32 : i32, i32
  }
  func.func @transform_1(%arg0: i32) -> (i32, i32) {
    %c0_i32 = arith.constant 0 : i32
    %c0_i32_0 = arith.constant 0 : i32
    return %arg0, %c0_i32 : i32, i32
  }
}

</mosaic_0001>

<llo_original>
// kernel: tpu_custom_call.1
$region0: #{tpu_custom_call.1}
  #allocation0 [shape = 'u32[]', space=smem, size = 0x4, offset = 0x4, fixed_abs, tag = 'smem constant byte address 0x4 - core index']
  #allocation1 [shape = 'u32[144,128]{1,0:T(1,128)}', space=vmem, size = 0x12000, scoped, tag = 'internal scratch']
  %s0 = inlined_call_operand.hbm [shape: f32[1024,128], index: 0, kind: input, shape index: {}]
  %s1 = inlined_call_operand.hbm [shape: f32[1024,128], index: 1, kind: output, shape index: {}]
  %s2 = sld [smem:[#allocation0]]
  $region41: #{tpu_custom_call.1} parent=0
    _
  %s4 = ssub.s32 1, %s2
  %s5 = scalar_select 0, %s4, %s2
  $region1: #{tpu_custom_call.1} parent=0
    #allocation2 [shape = 'u8[262144]{0}', space=vmem, size = 0x40000, scoped, tag = 'input window, operand 0']
    #allocation3 [shape = 's32[2]{0}', space=sflag, size = 0x8, scoped, tag = 'scoped memory for tpu_custom_call.1']
    #allocation4 [shape = 's32[2]{0}', space=sflag, size = 0x8, scoped, tag = 'scoped memory for tpu_custom_call.1']
    #allocation5 [shape = 'u8[262144]{0}', space=vmem, size = 0x40000, scoped, tag = 'output window, operand 0']
    %6 = vsyncpa [#allocation3], 0
    %s7 = scalar_lea.sflag [#allocation3], 1
    %8 = vsyncpa %s7, 0
    %9 = vsyncpa [#allocation4], 0
    %s10 = scalar_lea.sflag [#allocation4], 1
    %11 = vsyncpa %s10, 0
    loop: start=0, step=1, limit=6
    $region2: #{tpu_custom_call.1} parent=1 // loop_pre_header
      _
    $region3: #{tpu_custom_call.1} parent=1 // loop_header
      %s13 = sphi 0, %s17
      %p14 = scmp.ge.s32.totalorder %s13, 6
      %s23 = sphi 0, %s25
      %s26 = sphi 0, %s23
      %s27 = sphi 0, %s26
      %s43 = sphi 0, %s27
      %s49 = sphi 0, %s51
      %s52 = sphi 0, %s49
      %s53 = sphi 0, %s52
      %s69 = sphi 0, %s53
    $region4: #{tpu_custom_call.1} parent=1 // loop_header_branch
      %16 = sbr.rel (%p14) target = $region8
    $region5: #{tpu_custom_call.1} parent=1 // loop_body
      %s18 = ssub.s32 %s13, 1
      %s19 = ssub.s32 %s13, 2
      %s20 = sadd.s32 %s13, 1
      %s21 = ssub.s32 %s13, %s20
      %p22 = scmp.eq.s32.totalorder %s21, 0
      %s24 = sadd.s32 %s23, 1
      %s25 = scalar_select %p22, %s23, %s24
      %p28 = pneg %p22
      %p29 = scmp.eq.s32.totalorder %s13, 3
      %p30 = por %p28, %p29
      %p31 = scmp.ne.s32.totalorder %s23, %s26
      %p32 = scmp.eq.s32.totalorder %s13, 0
      %p33 = por %p31, %p32
      %p34 = scmp.ne.s32.totalorder %s23, %s26
      %p35 = scmp.eq.s32.totalorder %s18, 3
      %p36 = por %p34, %p35
      %p37 = scmp.ne.s32.totalorder %s26, %s27
      %p38 = scmp.eq.s32.totalorder %s18, 0
      %p39 = por %p37, %p38
      %p40 = scmp.ne.s32.totalorder %s26, %s27
      %p41 = scmp.eq.s32.totalorder %s19, 3
      %p42 = por %p40, %p41
      %p44 = scmp.ne.s32.totalorder %s27, %s43
      %p45 = scmp.eq.s32.totalorder %s19, 0
      %p46 = por %p44, %p45
      %s47 = ssub.s32 %s13, %s20
      %p48 = scmp.eq.s32.totalorder %s47, 0
      %s50 = sadd.s32 %s49, 1
      %s51 = scalar_select %p48, %s49, %s50
      %p54 = pneg %p48
      %p55 = scmp.eq.s32.totalorder %s13, 3
      %p56 = por %p54, %p55
      %p57 = scmp.ne.s32.totalorder %s49, %s52
      %p58 = scmp.eq.s32.totalorder %s13, 0
      %p59 = por %p57, %p58
      %p60 = scmp.ne.s32.totalorder %s49, %s52
      %p61 = scmp.eq.s32.totalorder %s18, 3
      %p62 = por %p60, %p61
      %p63 = scmp.ne.s32.totalorder %s52, %s53
      %p64 = scmp.eq.s32.totalorder %s18, 0
      %p65 = por %p63, %p64
      %p66 = scmp.ne.s32.totalorder %s52, %s53
      %p67 = scmp.eq.s32.totalorder %s19, 3
      %p68 = por %p66, %p67
      %p70 = scmp.ne.s32.totalorder %s53, %s69
      %p71 = scmp.eq.s32.totalorder %s19, 0
      %p72 = por %p70, %p71
      %p73 = scmp.le.s32.totalorder 1, %s13
      %p74 = scmp.lt.s32.totalorder %s13, 5
      %p75 = pnand %p73, %p74
      %p76 = pneg %p75
      // Predicated region
      $region9: #{tpu_custom_call.1} parent=5 // pred_check
        _
      $region10: #{tpu_custom_call.1} parent=5 // pred_check_branch
        %78 = sbr.rel (%p75) target = $region12
      $region11: #{tpu_custom_call.1} parent=5 // pred_region
        %s79 = ssub.s32 %s13, 1
      $region12: #{tpu_custom_call.1} parent=5 // pred_fallthru
        _
      %p80 = scmp.lt.s32.totalorder %s13, 4
      // Predicated region
      $region13: #{tpu_custom_call.1} parent=5 // pred_check
        %p81 = pneg %p80
      $region14: #{tpu_custom_call.1} parent=5 // pred_check_branch
        %83 = sbr.rel (%p81) target = $region16
      $region15: #{tpu_custom_call.1} parent=5 // pred_region
        // Predicated region
        $region17: #{tpu_custom_call.1} parent=15 // pred_check
          %p84 = pneg %p33
        $region18: #{tpu_custom_call.1} parent=15 // pred_check_branch
          %86 = sbr.rel (%p84) target = $region20
        $region19: #{tpu_custom_call.1} parent=15 // pred_region
          %s87 = sand.u32 %s23, 1
          %s88 = scalar_lea.sflag [#allocation3], %s87
          %s89 = sand.u32 %s23, 1
          %s90 = smul.addr %s89, 256
          %s91 = scalar_lea.vmem [#allocation2], %s90
          %s92 = smul.u32 32, %s13
          %s94 = ssub.s32 4096, 4096
          %95 = vsyncadd %s88, %s94
          %s96 = smul.addr %s92, 128
          %s97 = scalar_lea.hbm %s0, %s96
          %s98 = sshll.u32 %s91, 4
          %s99 = int_to_ptr.vmem [resolvable:$true] %s98
          %104 = dma.hbm_to_vmem [thread:$0]  %s97, 4096, %s99, %s88, 128, 128, 8
        $region20: #{tpu_custom_call.1} parent=15 // pred_fallthru
          _
      $region16: #{tpu_custom_call.1} parent=5 // pred_fallthru
        _
      %p105 = scmp.le.s32.totalorder 1, %s13
      %p106 = scmp.lt.s32.totalorder %s13, 5
      %p107 = pnand %p105, %p106
      %p108 = pneg %p107
      // Predicated region
      $region21: #{tpu_custom_call.1} parent=5 // pred_check
        _
      $region22: #{tpu_custom_call.1} parent=5 // pred_check_branch
        %110 = sbr.rel (%p107) target = $region24
      $region23: #{tpu_custom_call.1} parent=5 // pred_region
        %s111 = ssub.s32 %s13, 1
        %s112 = sand.u32 %s26, 1
        %s113 = scalar_lea.sflag [#allocation3], %s112
        %s114 = sand.u32 %s26, 1
        %s115 = smul.addr %s114, 256
        %s116 = scalar_lea.vmem [#allocation2], %s115
        // Predicated region
        $region25: #{tpu_custom_call.1} parent=23 // pred_check
          %p117 = pneg %p39
        $region26: #{tpu_custom_call.1} parent=23 // pred_check_branch
          %119 = sbr.rel (%p117) target = $region28
        $region27: #{tpu_custom_call.1} parent=23 // pred_region
          %120 = dma.done %s113, 4096
        $region28: #{tpu_custom_call.1} parent=23 // pred_fallthru
          _
        %s121 = sand.u32 %s26, 1
        %s122 = scalar_lea.sflag [#allocation3], %s121
        %s123 = sand.u32 %s26, 1
        %s124 = smul.addr %s123, 256
        %s125 = scalar_lea.vmem [#allocation2], %s124
        %p126 = pneg %p39
        %p127 = pneg %p36
        %p128 = pneg %p65
        %p129 = pneg %p62
        %s130 = sand.u32 %s52, 1
        %s131 = scalar_lea.sflag [#allocation4], %s130
        %s132 = sand.u32 %s52, 1
        %s133 = smul.addr %s132, 256
        %s134 = scalar_lea.vmem [#allocation5], %s133
        %s135 = smul.u32 32, %s18
        %s136 = smul.u32 32, %s18
        %v137 = vld [vmem:[%s116] sm:$0xff]
        %v138 = vld [vmem:[%s116 + $0x8] sm:$0xff]
        %v139 = vld [vmem:[%s116 + $0x10] sm:$0xff]
        %v140 = vld [vmem:[%s116 + $0x18] sm:$0xff]
        %v141 = vld [vmem:[%s116 + $0x20] sm:$0xff]
        %v142 = vld [vmem:[%s116 + $0x28] sm:$0xff]
        %v143 = vld [vmem:[%s116 + $0x30] sm:$0xff]
        %v144 = vld [vmem:[%s116 + $0x38] sm:$0xff]
        %v145 = vld [vmem:[%s116 + $0x40] sm:$0xff]
        %v146 = vld [vmem:[%s116 + $0x48] sm:$0xff]
        %v147 = vld [vmem:[%s116 + $0x50] sm:$0xff]
        %v148 = vld [vmem:[%s116 + $0x58] sm:$0xff]
        %v149 = vld [vmem:[%s116 + $0x60] sm:$0xff]
        %v150 = vld [vmem:[%s116 + $0x68] sm:$0xff]
        %v151 = vld [vmem:[%s116 + $0x70] sm:$0xff]
        %v152 = vld [vmem:[%s116 + $0x78] sm:$0xff]
        %v153 = vld [vmem:[%s116 + $0x80] sm:$0xff]
        %v154 = vld [vmem:[%s116 + $0x88] sm:$0xff]
        %v155 = vld [vmem:[%s116 + $0x90] sm:$0xff]
        %v156 = vld [vmem:[%s116 + $0x98] sm:$0xff]
        %v157 = vld [vmem:[%s116 + $0xa0] sm:$0xff]
        %v158 = vld [vmem:[%s116 + $0xa8] sm:$0xff]
        %v159 = vld [vmem:[%s116 + $0xb0] sm:$0xff]
        %v160 = vld [vmem:[%s116 + $0xb8] sm:$0xff]
        %v161 = vld [vmem:[%s116 + $0xc0] sm:$0xff]
        %v162 = vld [vmem:[%s116 + $0xc8] sm:$0xff]
        %v163 = vld [vmem:[%s116 + $0xd0] sm:$0xff]
        %v164 = vld [vmem:[%s116 + $0xd8] sm:$0xff]
        %v165 = vld [vmem:[%s116 + $0xe0] sm:$0xff]
        %v166 = vld [vmem:[%s116 + $0xe8] sm:$0xff]
        %v167 = vld [vmem:[%s116 + $0xf0] sm:$0xff]
        %v168 = vld [vmem:[%s116 + $0xf8] sm:$0xff]
        %v169 = vadd.f32 %v137, 5.0
        %v170 = vadd.f32 %v138, 5.0
        %v171 = vadd.f32 %v139, 5.0
        %v172 = vadd.f32 %v140, 5.0
        %v173 = vadd.f32 %v141, 5.0
        %v174 = vadd.f32 %v142, 5.0
        %v175 = vadd.f32 %v143, 5.0
        %v176 = vadd.f32 %v144, 5.0
        %v177 = vadd.f32 %v145, 5.0
        %v178 = vadd.f32 %v146, 5.0
        %v179 = vadd.f32 %v147, 5.0
        %v180 = vadd.f32 %v148, 5.0
        %v181 = vadd.f32 %v149, 5.0
        %v182 = vadd.f32 %v150, 5.0
        %v183 = vadd.f32 %v151, 5.0
        %v184 = vadd.f32 %v152, 5.0
        %v185 = vadd.f32 %v153, 5.0
        %v186 = vadd.f32 %v154, 5.0
        %v187 = vadd.f32 %v155, 5.0
        %v188 = vadd.f32 %v156, 5.0
        %v189 = vadd.f32 %v157, 5.0
        %v190 = vadd.f32 %v158, 5.0
        %v191 = vadd.f32 %v159, 5.0
        %v192 = vadd.f32 %v160, 5.0
        %v193 = vadd.f32 %v161, 5.0
        %v194 = vadd.f32 %v162, 5.0
        %v195 = vadd.f32 %v163, 5.0
        %v196 = vadd.f32 %v164, 5.0
        %v197 = vadd.f32 %v165, 5.0
        %v198 = vadd.f32 %v166, 5.0
        %v199 = vadd.f32 %v167, 5.0
        %v200 = vadd.f32 %v168, 5.0
        %v201 = vmul.f32 %v169, %v169
        %v202 = vmul.f32 %v170, %v170
        %v203 = vmul.f32 %v171, %v171
        %v204 = vmul.f32 %v172, %v172
        %v205 = vmul.f32 %v173, %v173
        %v206 = vmul.f32 %v174, %v174
        %v207 = vmul.f32 %v175, %v175
        %v208 = vmul.f32 %v176, %v176
        %v209 = vmul.f32 %v177, %v177
        %v210 = vmul.f32 %v178, %v178
        %v211 = vmul.f32 %v179, %v179
        %v212 = vmul.f32 %v180, %v180
        %v213 = vmul.f32 %v181, %v181
        %v214 = vmul.f32 %v182, %v182
        %v215 = vmul.f32 %v183, %v183
        %v216 = vmul.f32 %v184, %v184
        %v217 = vmul.f32 %v185, %v185
        %v218 = vmul.f32 %v186, %v186
        %v219 = vmul.f32 %v187, %v187
        %v220 = vmul.f32 %v188, %v188
        %v221 = vmul.f32 %v189, %v189
        %v222 = vmul.f32 %v190, %v190
        %v223 = vmul.f32 %v191, %v191
        %v224 = vmul.f32 %v192, %v192
        %v225 = vmul.f32 %v193, %v193
        %v226 = vmul.f32 %v194, %v194
        %v227 = vmul.f32 %v195, %v195
        %v228 = vmul.f32 %v196, %v196
        %v229 = vmul.f32 %v197, %v197
        %v230 = vmul.f32 %v198, %v198
        %v231 = vmul.f32 %v199, %v199
        %v232 = vmul.f32 %v200, %v200
        %233 = vadd.xlane.f32.xlu0 %v201
        %v234 = vpop.xlane.xlu0 %233
        %235 = vadd.xlane.f32.xlu0 %v202
        %v236 = vpop.xlane.xlu0 %235
        %237 = vadd.xlane.f32.xlu0 %v203
        %v238 = vpop.xlane.xlu0 %237
        %239 = vadd.xlane.f32.xlu0 %v204
        %v240 = vpop.xlane.xlu0 %239
        %241 = vadd.xlane.f32.xlu0 %v205
        %v242 = vpop.xlane.xlu0 %241
        %243 = vadd.xlane.f32.xlu0 %v206
        %v244 = vpop.xlane.xlu0 %243
        %245 = vadd.xlane.f32.xlu0 %v207
        %v246 = vpop.xlane.xlu0 %245
        %247 = vadd.xlane.f32.xlu0 %v208
        %v248 = vpop.xlane.xlu0 %247
        %249 = vadd.xlane.f32.xlu0 %v209
        %v250 = vpop.xlane.xlu0 %249
        %251 = vadd.xlane.f32.xlu0 %v210
        %v252 = vpop.xlane.xlu0 %251
        %253 = vadd.xlane.f32.xlu0 %v211
        %v254 = vpop.xlane.xlu0 %253
        %255 = vadd.xlane.f32.xlu0 %v212
        %v256 = vpop.xlane.xlu0 %255
        %257 = vadd.xlane.f32.xlu0 %v213
        %v258 = vpop.xlane.xlu0 %257
        %259 = vadd.xlane.f32.xlu0 %v214
        %v260 = vpop.xlane.xlu0 %259
        %261 = vadd.xlane.f32.xlu0 %v215
        %v262 = vpop.xlane.xlu0 %261
        %263 = vadd.xlane.f32.xlu0 %v216
        %v264 = vpop.xlane.xlu0 %263
        %265 = vadd.xlane.f32.xlu0 %v217
        %v266 = vpop.xlane.xlu0 %265
        %267 = vadd.xlane.f32.xlu0 %v218
        %v268 = vpop.xlane.xlu0 %267
        %269 = vadd.xlane.f32.xlu0 %v219
        %v270 = vpop.xlane.xlu0 %269
        %271 = vadd.xlane.f32.xlu0 %v220
        %v272 = vpop.xlane.xlu0 %271
        %273 = vadd.xlane.f32.xlu0 %v221
        %v274 = vpop.xlane.xlu0 %273
        %275 = vadd.xlane.f32.xlu0 %v222
        %v276 = vpop.xlane.xlu0 %275
        %277 = vadd.xlane.f32.xlu0 %v223
        %v278 = vpop.xlane.xlu0 %277
        %279 = vadd.xlane.f32.xlu0 %v224
        %v280 = vpop.xlane.xlu0 %279
        %281 = vadd.xlane.f32.xlu0 %v225
        %v282 = vpop.xlane.xlu0 %281
        %283 = vadd.xlane.f32.xlu0 %v226
        %v284 = vpop.xlane.xlu0 %283
        %285 = vadd.xlane.f32.xlu0 %v227
        %v286 = vpop.xlane.xlu0 %285
        %287 = vadd.xlane.f32.xlu0 %v228
        %v288 = vpop.xlane.xlu0 %287
        %289 = vadd.xlane.f32.xlu0 %v229
        %v290 = vpop.xlane.xlu0 %289
        %291 = vadd.xlane.f32.xlu0 %v230
        %v292 = vpop.xlane.xlu0 %291
        %293 = vadd.xlane.f32.xlu0 %v231
        %v294 = vpop.xlane.xlu0 %293
        %295 = vadd.xlane.f32.xlu0 %v232
        %v296 = vpop.xlane.xlu0 %295
        %v297 = vrcp.pop %v234
        %v298 = vrcp.pop %v236
        %v299 = vrcp.pop %v238
        %v300 = vrcp.pop %v240
        %v301 = vrcp.pop %v242
        %v302 = vrcp.pop %v244
        %v303 = vrcp.pop %v246
        %v304 = vrcp.pop %v248
        %v305 = vrcp.pop %v250
        %v306 = vrcp.pop %v252
        %v307 = vrcp.pop %v254
        %v308 = vrcp.pop %v256
        %v309 = vrcp.pop %v258
        %v310 = vrcp.pop %v260
        %v311 = vrcp.pop %v262
        %v312 = vrcp.pop %v264
        %v313 = vrcp.pop %v266
        %v314 = vrcp.pop %v268
        %v315 = vrcp.pop %v270
        %v316 = vrcp.pop %v272
        %v317 = vrcp.pop %v274
        %v318 = vrcp.pop %v276
        %v319 = vrcp.pop %v278
        %v320 = vrcp.pop %v280
        %v321 = vrcp.pop %v282
        %v322 = vrcp.pop %v284
        %v323 = vrcp.pop %v286
        %v324 = vrcp.pop %v288
        %v325 = vrcp.pop %v290
        %v326 = vrcp.pop %v292
        %v327 = vrcp.pop %v294
        %v328 = vrcp.pop %v296
        %v329 = vmul.f32 %v201, %v297
        %v330 = vmul.f32 %v202, %v298
        %v331 = vmul.f32 %v203, %v299
        %v332 = vmul.f32 %v204, %v300
        %v333 = vmul.f32 %v205, %v301
        %v334 = vmul.f32 %v206, %v302
        %v335 = vmul.f32 %v207, %v303
        %v336 = vmul.f32 %v208, %v304
        %v337 = vmul.f32 %v209, %v305
        %v338 = vmul.f32 %v210, %v306
        %v339 = vmul.f32 %v211, %v307
        %v340 = vmul.f32 %v212, %v308
        %v341 = vmul.f32 %v213, %v309
        %v342 = vmul.f32 %v214, %v310
        %v343 = vmul.f32 %v215, %v311
        %v344 = vmul.f32 %v216, %v312
        %v345 = vmul.f32 %v217, %v313
        %v346 = vmul.f32 %v218, %v314
        %v347 = vmul.f32 %v219, %v315
        %v348 = vmul.f32 %v220, %v316
        %v349 = vmul.f32 %v221, %v317
        %v350 = vmul.f32 %v222, %v318
        %v351 = vmul.f32 %v223, %v319
        %v352 = vmul.f32 %v224, %v320
        %v353 = vmul.f32 %v225, %v321
        %v354 = vmul.f32 %v226, %v322
        %v355 = vmul.f32 %v227, %v323
        %v356 = vmul.f32 %v228, %v324
        %v357 = vmul.f32 %v229, %v325
        %v358 = vmul.f32 %v230, %v326
        %v359 = vmul.f32 %v231, %v327
        %v360 = vmul.f32 %v232, %v328
        %361 = vst [vmem:[%s134] sm:$0xff] %v329
        %362 = vst [vmem:[%s134 + $0x8] sm:$0xff] %v330
        %363 = vst [vmem:[%s134 + $0x10] sm:$0xff] %v331
        %364 = vst [vmem:[%s134 + $0x18] sm:$0xff] %v332
        %365 = vst [vmem:[%s134 + $0x20] sm:$0xff] %v333
        %366 = vst [vmem:[%s134 + $0x28] sm:$0xff] %v334
        %367 = vst [vmem:[%s134 + $0x30] sm:$0xff] %v335
        %368 = vst [vmem:[%s134 + $0x38] sm:$0xff] %v336
        %369 = vst [vmem:[%s134 + $0x40] sm:$0xff] %v337
        %370 = vst [vmem:[%s134 + $0x48] sm:$0xff] %v338
        %371 = vst [vmem:[%s134 + $0x50] sm:$0xff] %v339
        %372 = vst [vmem:[%s134 + $0x58] sm:$0xff] %v340
        %373 = vst [vmem:[%s134 + $0x60] sm:$0xff] %v341
        %374 = vst [vmem:[%s134 + $0x68] sm:$0xff] %v342
        %375 = vst [vmem:[%s134 + $0x70] sm:$0xff] %v343
        %376 = vst [vmem:[%s134 + $0x78] sm:$0xff] %v344
        %377 = vst [vmem:[%s134 + $0x80] sm:$0xff] %v345
        %378 = vst [vmem:[%s134 + $0x88] sm:$0xff] %v346
        %379 = vst [vmem:[%s134 + $0x90] sm:$0xff] %v347
        %380 = vst [vmem:[%s134 + $0x98] sm:$0xff] %v348
        %381 = vst [vmem:[%s134 + $0xa0] sm:$0xff] %v349
        %382 = vst [vmem:[%s134 + $0xa8] sm:$0xff] %v350
        %383 = vst [vmem:[%s134 + $0xb0] sm:$0xff] %v351
        %384 = vst [vmem:[%s134 + $0xb8] sm:$0xff] %v352
        %385 = vst [vmem:[%s134 + $0xc0] sm:$0xff] %v353
        %386 = vst [vmem:[%s134 + $0xc8] sm:$0xff] %v354
        %387 = vst [vmem:[%s134 + $0xd0] sm:$0xff] %v355
        %388 = vst [vmem:[%s134 + $0xd8] sm:$0xff] %v356
        %389 = vst [vmem:[%s134 + $0xe0] sm:$0xff] %v357
        %390 = vst [vmem:[%s134 + $0xe8] sm:$0xff] %v358
        %391 = vst [vmem:[%s134 + $0xf0] sm:$0xff] %v359
        %392 = vst [vmem:[%s134 + $0xf8] sm:$0xff] %v360
        %s393 = sand.u32 %s52, 1
        %s394 = scalar_lea.sflag [#allocation4], %s393
        %s395 = sand.u32 %s52, 1
        %s396 = smul.addr %s395, 256
        %s397 = scalar_lea.vmem [#allocation5], %s396
        // Predicated region
        $region29: #{tpu_custom_call.1} parent=23 // pred_check
          %p398 = pneg %p62
        $region30: #{tpu_custom_call.1} parent=23 // pred_check_branch
          %400 = sbr.rel (%p398) target = $region32
        $region31: #{tpu_custom_call.1} parent=23 // pred_region
          %s401 = smul.u32 32, %s18
          %s403 = ssub.s32 4096, 4096
          %404 = vsyncadd %s394, %s403
          %s405 = smul.addr %s401, 128
          %s406 = scalar_lea.hbm %s1, %s405
          %s407 = sshll.u32 %s397, 4
          %s408 = int_to_ptr.vmem [resolvable:$true] %s407
          %413 = dma.vmem_to_hbm [thread:$0]  %s408, 4096, %s406, %s394, 128, 128, 8
        $region32: #{tpu_custom_call.1} parent=23 // pred_fallthru
          _
      $region24: #{tpu_custom_call.1} parent=5 // pred_fallthru
        _
      %p414 = scmp.le.s32.totalorder 2, %s13
      // Predicated region
      $region33: #{tpu_custom_call.1} parent=5 // pred_check
        %p415 = pneg %p414
      $region34: #{tpu_custom_call.1} parent=5 // pred_check_branch
        %417 = sbr.rel (%p415) target = $region36
      $region35: #{tpu_custom_call.1} parent=5 // pred_region
        %s418 = ssub.s32 %s13, 2
        // Predicated region
        $region37: #{tpu_custom_call.1} parent=35 // pred_check
          %p419 = pneg %p68
        $region38: #{tpu_custom_call.1} parent=35 // pred_check_branch
          %421 = sbr.rel (%p419) target = $region40
        $region39: #{tpu_custom_call.1} parent=35 // pred_region
          %s422 = sand.u32 %s53, 1
          %s423 = scalar_lea.sflag [#allocation4], %s422
          %s424 = sand.u32 %s53, 1
          %s425 = smul.addr %s424, 256
          %s426 = scalar_lea.vmem [#allocation5], %s425
          %427 = dma.done %s423, 4096
        $region40: #{tpu_custom_call.1} parent=35 // pred_fallthru
          _
      $region36: #{tpu_custom_call.1} parent=5 // pred_fallthru
        _
    $region6: #{tpu_custom_call.1} parent=1 // loop_footer
      %s17 = sadd.s32 1, %s13
    $region7: #{tpu_custom_call.1} parent=1 // loop_footer_branch
      %12 = sbr.rel target = $region3
    $region8: #{tpu_custom_call.1} parent=1 // loop_exit
      _
    %428 = vsyncpa [#allocation3], 1
    %s429 = scalar_lea.sflag [#allocation3], 1
    %430 = vsyncpa %s429, 1
    %431 = vsyncpa [#allocation4], 1
    %s432 = scalar_lea.sflag [#allocation4], 1
    %433 = vsyncpa %s432, 1

</llo_original>
